<compile_context>
chip_gen: v7x
topology: tpu7x:2x2x1
jax: 0.10.0
libtpu: 0.0.40
codegen_flags: <defaults>
</compile_context>

<pallas_src>
import functools

import jax
import jax.numpy as jnp
from jax.experimental import pallas as pl
from jax.experimental.pallas import tpu as pltpu


def _d_net_gauss_kernel(x_ref, w1_ref, b1_ref, w2_ref, b2_ref,
                        w3_ref, b3_ref, out_ref):
    bf16 = jnp.bfloat16

    # --- lin1 + (dropout: identity in eval) + relu ---
    # TODO(synk): training-mode dropout (p=0.2) omitted; eval-mode semantics.
    x = x_ref[...].astype(bf16)            # in-register cast; x stays f32 in HBM
    h = jnp.dot(x, w1_ref[...], preferred_element_type=jnp.float32)
    h = jnp.maximum(h + b1_ref[...], 0.0)

    # --- lin2 + (dropout: identity in eval) + relu ---
    h = jnp.dot(h.astype(bf16), w2_ref[...], preferred_element_type=jnp.float32)
    h = jnp.maximum(h + b2_ref[...], 0.0)

    # --- lin3: width-1 output via VPU multiply + lane reduction (no MXU,
    #     no 128-wide output slab). Padded lanes of h / w3 are zero -> exact.
    out = jnp.sum(h * w3_ref[...], axis=-1, keepdims=True) + b3_ref[...]
    out_ref[...] = out.astype(out_ref.dtype)


def _round_up(v, m):
    return ((v + m - 1) // m) * m


def _const_spec(shape):
    """BlockSpec for a grid-invariant operand (weights/biases).

    index_map is constant, so the block is never re-fetched; single-buffer it
    to avoid allocating a useless second VMEM buffer."""
    index_map = lambda i: (0,) * len(shape)
    try:
        return pl.BlockSpec(shape, index_map, pipeline_mode=pl.Buffered(1))
    except TypeError:  # older BlockSpec signature without pipeline_mode
        return pl.BlockSpec(shape, index_map)


@functools.partial(jax.jit, static_argnames=("block_b",))
def d_net_gauss_forward(x, w1, b1, w2, b2, w3, b3, *, block_b=None):
    """x: (B, z_dim); weights pre-transposed to (in, out); biases as (1, out)."""
    B, z_dim = x.shape
    N = w1.shape[1]
    f32, bf16 = jnp.float32, jnp.bfloat16

    # Zero-pad the hidden width to a multiple of 128 (lane-dense h; exact math:
    # zero rows/cols + zero bias pad + relu(0)=0 contribute nothing).
    N_pad = _round_up(N, 128)
    pad_n = N_pad - N
    if pad_n:
        w1 = jnp.pad(w1, ((0, 0), (0, pad_n)))
        b1 = jnp.pad(b1, ((0, 0), (0, pad_n)))
        w2 = jnp.pad(w2, ((0, pad_n), (0, pad_n)))
        b2 = jnp.pad(b2, ((0, 0), (0, pad_n)))
        w3 = jnp.pad(w3, ((0, pad_n), (0, 0)))

    # Weights for the MXU in bf16 (f32 accumulate); biases / w3 row stay f32.
    w1_bf = w1.astype(bf16)
    w2_bf = w2.astype(bf16)
    w3_row = jnp.transpose(w3).astype(f32)      # (1, N_pad)
    b1_f = b1.astype(f32)
    b2_f = b2.astype(f32)
    b3_f = b3.astype(f32)                       # (1, 1)

    if block_b is None:
        # Big, sublane-aligned batch tiles amortize the ~0.35 us/step overhead.
        block_b = min(1024, _round_up(max(B, 8), 8))
    grid_b = pl.cdiv(B, block_b)
    if grid_b > 1 and grid_b % 2 == 1:
        # Even grid so v7x's two TensorCores split the parallel axis evenly;
        # harmless on single-TC v5e/v6e.
        block_b = _round_up(pl.cdiv(B, grid_b + 1), 8)
        grid_b = pl.cdiv(B, block_b)

    out = pl.pallas_call(
        _d_net_gauss_kernel,
        out_shape=jax.ShapeDtypeStruct((B, 1), f32),
        grid_spec=pltpu.PrefetchScalarGridSpec(
            num_scalar_prefetch=0,
            grid=(grid_b,),
            in_specs=[
                pl.BlockSpec((block_b, z_dim), lambda i: (i, 0)),  # x tile (f32)
                _const_spec((z_dim, N_pad)),   # W1^T (bf16)
                _const_spec((1, N_pad)),       # b1   (f32)
                _const_spec((N_pad, N_pad)),   # W2^T (bf16)
                _const_spec((1, N_pad)),       # b2   (f32)
                _const_spec((1, N_pad)),       # w3 row (f32)
                _const_spec((1, 1)),           # b3   (f32)
            ],
            out_specs=pl.BlockSpec((block_b, 1), lambda i: (i, 0)),
        ),
        compiler_params=pltpu.CompilerParams(
            dimension_semantics=("parallel",)),
    )(x.astype(f32), w1_bf, b1_f, w2_bf, b2_f, w3_row, b3_f)

    return out.astype(x.dtype)


def init_params(key, z_dim, N, dtype=jnp.float32):
    """Deterministic init mirroring nn.Linear's U(-1/sqrt(in), 1/sqrt(in)).

    Weights stored pre-transposed as (in_features, out_features)."""
    ks = jax.random.split(key, 6)

    def lin(kw, kb, fan_in, fan_out):
        bound = 1.0 / jnp.sqrt(float(fan_in))
        w = jax.random.uniform(kw, (fan_in, fan_out), dtype, -bound, bound)
        b = jax.random.uniform(kb, (1, fan_out), dtype, -bound, bound)
        return w, b

    w1, b1 = lin(ks[0], ks[1], z_dim, N)
    w2, b2 = lin(ks[2], ks[3], N, N)
    w3, b3 = lin(ks[4], ks[5], N, 1)
    return w1, b1, w2, b2, w3, b3


def reference_forward(x, w1, b1, w2, b2, w3, b3):
    """Pure-JAX reference matching the kernel math (bf16 matmuls, f32 lin3)."""
    bf16, f32 = jnp.bfloat16, jnp.float32
    h = jnp.dot(x.astype(bf16), w1.astype(bf16), preferred_element_type=f32) + b1
    h = jnp.maximum(h, 0.0)
    h = jnp.dot(h.astype(bf16), w2.astype(bf16), preferred_element_type=f32) + b2
    h = jnp.maximum(h, 0.0)
    return jnp.dot(h, w3.astype(f32)) + b3


if __name__ == "__main__":
    # Small shapes consistent with the module: z_dim=input dim, N=hidden.
    B, z_dim, N = 8, 32, 64

    key = jax.random.PRNGKey(0)
    kx, kx2, kp = jax.random.split(key, 3)
    params = init_params(kp, z_dim, N)

    # Aligned batch.
    x = jax.random.normal(kx, (B, z_dim), jnp.float32)
    out = jax.block_until_ready(d_net_gauss_forward(x, *params))
    ref = reference_forward(x, *params)
    assert out.shape == (B, 1), out.shape
    err = float(jnp.max(jnp.abs(out - ref)))
    assert jnp.allclose(out, ref, atol=5e-3, rtol=5e-3), f"mismatch: {err}"

    # Ragged batch (exercises masked partial-block writeback, no jnp.pad of x).
    B2 = 37
    x2 = jax.random.normal(kx2, (B2, z_dim), jnp.float32)
    out2 = jax.block_until_ready(d_net_gauss_forward(x2, *params))
    ref2 = reference_forward(x2, *params)
    assert out2.shape == (B2, 1), out2.shape
    err2 = float(jnp.max(jnp.abs(out2 - ref2)))
    assert jnp.allclose(out2, ref2, atol=5e-3, rtol=5e-3), f"mismatch: {err2}"

    print("KERNEL_OK")
</pallas_src>

<mosaic_0001>
module attributes {stable_mosaic.version = 11 : i64} {
  func.func @_d_net_gauss_kernel(%arg0: i32, %arg1: memref<8x32xf32, #tpu.memory_space<vmem>>, %arg2: memref<32x128xbf16, #tpu.memory_space<vmem>>, %arg3: memref<1x128xf32, #tpu.memory_space<vmem>>, %arg4: memref<128x128xbf16, #tpu.memory_space<vmem>>, %arg5: memref<1x128xf32, #tpu.memory_space<vmem>>, %arg6: memref<1x128xf32, #tpu.memory_space<vmem>>, %arg7: memref<1x1xf32, #tpu.memory_space<vmem>>, %arg8: memref<8x1xf32, #tpu.memory_space<vmem>>) attributes {dimension_semantics = [#tpu.dimension_semantics<parallel>], iteration_bounds = array<i64: 1>, scalar_prefetch = 0 : i64, scratch_operands = 0 : i64, tpu.core_type = #tpu.core_type<tc>, window_params = [{transform_indices = @transform_0, window_bounds = array<i64: 8, 32>}, {pipeline_mode = #tpu.pipeline_mode<synchronous>, transform_indices = @transform_1, window_bounds = array<i64: 32, 128>}, {pipeline_mode = #tpu.pipeline_mode<synchronous>, transform_indices = @transform_2, window_bounds = array<i64: 1, 128>}, {pipeline_mode = #tpu.pipeline_mode<synchronous>, transform_indices = @transform_3, window_bounds = array<i64: 128, 128>}, {pipeline_mode = #tpu.pipeline_mode<synchronous>, transform_indices = @transform_4, window_bounds = array<i64: 1, 128>}, {pipeline_mode = #tpu.pipeline_mode<synchronous>, transform_indices = @transform_5, window_bounds = array<i64: 1, 128>}, {pipeline_mode = #tpu.pipeline_mode<synchronous>, transform_indices = @transform_6, window_bounds = array<i64: 1, 1>}, {transform_indices = @transform_7, window_bounds = array<i64: 8, 1>}]} {
    %c0 = arith.constant 0 : index
    %c0_0 = arith.constant 0 : index
    %0 = vector.load %arg1[%c0, %c0_0] : memref<8x32xf32, #tpu.memory_space<vmem>>, vector<8x32xf32>
    %1 = arith.truncf %0 : vector<8x32xf32> to vector<8x32xbf16>
    %c0_1 = arith.constant 0 : index
    %c0_2 = arith.constant 0 : index
    %2 = vector.load %arg2[%c0_1, %c0_2] : memref<32x128xbf16, #tpu.memory_space<vmem>>, vector<32x128xbf16>
    %cst = arith.constant dense<0.000000e+00> : vector<8x128xf32>
    %3 = tpu.matmul %1, %2, %cst {dimension_numbers = #tpu.dot_dimension_numbers<[1], [0], [0], [1], [0, 0, 1, 1], [], []>} : vector<8x32xbf16>, vector<32x128xbf16>, vector<8x128xf32> -> vector<8x128xf32>
    %c0_3 = arith.constant 0 : index
    %c0_4 = arith.constant 0 : index
    %4 = vector.load %arg3[%c0_3, %c0_4] : memref<1x128xf32, #tpu.memory_space<vmem>>, vector<1x128xf32>
    %5 = vector.broadcast %4 : vector<1x128xf32> to vector<8x128xf32>
    %6 = arith.addf %3, %5 : vector<8x128xf32>
    %cst_5 = arith.constant 0.000000e+00 : f32
    %7 = vector.broadcast %cst_5 : f32 to vector<8x128xf32>
    %8 = arith.maximumf %6, %7 : vector<8x128xf32>
    %9 = arith.truncf %8 : vector<8x128xf32> to vector<8x128xbf16>
    %c0_6 = arith.constant 0 : index
    %c0_7 = arith.constant 0 : index
    %10 = vector.load %arg4[%c0_6, %c0_7] : memref<128x128xbf16, #tpu.memory_space<vmem>>, vector<128x128xbf16>
    %cst_8 = arith.constant dense<0.000000e+00> : vector<8x128xf32>
    %11 = tpu.matmul %9, %10, %cst_8 {dimension_numbers = #tpu.dot_dimension_numbers<[1], [0], [0], [1], [0, 0, 1, 1], [], []>} : vector<8x128xbf16>, vector<128x128xbf16>, vector<8x128xf32> -> vector<8x128xf32>
    %c0_9 = arith.constant 0 : index
    %c0_10 = arith.constant 0 : index
    %12 = vector.load %arg5[%c0_9, %c0_10] : memref<1x128xf32, #tpu.memory_space<vmem>>, vector<1x128xf32>
    %13 = vector.broadcast %12 : vector<1x128xf32> to vector<8x128xf32>
    %14 = arith.addf %11, %13 : vector<8x128xf32>
    %cst_11 = arith.constant 0.000000e+00 : f32
    %15 = vector.broadcast %cst_11 : f32 to vector<8x128xf32>
    %16 = arith.maximumf %14, %15 : vector<8x128xf32>
    %c0_12 = arith.constant 0 : index
    %c0_13 = arith.constant 0 : index
    %17 = vector.load %arg6[%c0_12, %c0_13] : memref<1x128xf32, #tpu.memory_space<vmem>>, vector<1x128xf32>
    %18 = vector.broadcast %17 : vector<1x128xf32> to vector<8x128xf32>
    %19 = arith.mulf %16, %18 : vector<8x128xf32>
    %cst_14 = arith.constant dense<0.000000e+00> : vector<8xf32>
    %20 = vector.multi_reduction <add>, %19, %cst_14 [1] : vector<8x128xf32> to vector<8xf32>
    %21 = vector.shape_cast %20 : vector<8xf32> to vector<8x1xf32>
    %c0_15 = arith.constant 0 : index
    %c0_16 = arith.constant 0 : index
    %22 = vector.load %arg7[%c0_15, %c0_16] : memref<1x1xf32, #tpu.memory_space<vmem>>, vector<1x1xf32>
    %23 = vector.broadcast %22 : vector<1x1xf32> to vector<8x1xf32>
    %24 = arith.addf %21, %23 : vector<8x1xf32>
    %c0_17 = arith.constant 0 : index
    %c0_18 = arith.constant 0 : index
    %25 = vector.load %arg8[%c0_17, %c0_18] : memref<8x1xf32, #tpu.memory_space<vmem>>, vector<8x1xf32>
    tpu.vector_store %arg8[%c0_17, %c0_18], %24 {strides = array<i32>} : memref<8x1xf32, #tpu.memory_space<vmem>>, vector<8x1xf32>,
    return
  }
  func.func @transform_0(%arg0: i32) -> (i32, i32) {
    %c0_i32 = arith.constant 0 : i32
    %c0_i32_0 = arith.constant 0 : i32
    return %arg0, %c0_i32 : i32, i32
  }
  func.func @transform_1(%arg0: i32) -> (i32, i32) {
    %c0_i32 = arith.constant 0 : i32
    %c0_i32_0 = arith.constant 0 : i32
    %c0_i32_1 = arith.constant 0 : i32
    return %c0_i32, %c0_i32_0 : i32, i32
  }
  func.func @transform_2(%arg0: i32) -> (i32, i32) {
    %c0_i32 = arith.constant 0 : i32
    %c0_i32_0 = arith.constant 0 : i32
    %c0_i32_1 = arith.constant 0 : i32
    return %c0_i32, %c0_i32_0 : i32, i32
  }
  func.func @transform_3(%arg0: i32) -> (i32, i32) {
    %c0_i32 = arith.constant 0 : i32
    %c0_i32_0 = arith.constant 0 : i32
    %c0_i32_1 = arith.constant 0 : i32
    return %c0_i32, %c0_i32_0 : i32, i32
  }
  func.func @transform_4(%arg0: i32) -> (i32, i32) {
    %c0_i32 = arith.constant 0 : i32
    %c0_i32_0 = arith.constant 0 : i32
    %c0_i32_1 = arith.constant 0 : i32
    return %c0_i32, %c0_i32_0 : i32, i32
  }
  func.func @transform_5(%arg0: i32) -> (i32, i32) {
    %c0_i32 = arith.constant 0 : i32
    %c0_i32_0 = arith.constant 0 : i32
    %c0_i32_1 = arith.constant 0 : i32
    return %c0_i32, %c0_i32_0 : i32, i32
  }
  func.func @transform_6(%arg0: i32) -> (i32, i32) {
    %c0_i32 = arith.constant 0 : i32
    %c0_i32_0 = arith.constant 0 : i32
    %c0_i32_1 = arith.constant 0 : i32
    return %c0_i32, %c0_i32_0 : i32, i32
  }
  func.func @transform_7(%arg0: i32) -> (i32, i32) {
    %c0_i32 = arith.constant 0 : i32
    %c0_i32_0 = arith.constant 0 : i32
    return %arg0, %c0_i32 : i32, i32
  }
}

</mosaic_0001>

<llo_original>
// kernel: d_net_gauss_forward.1
$region0: #{d_net_gauss_forward.1}
  #allocation0 [shape = 'u32[]', space=smem, size = 0x4, offset = 0x4, fixed_abs, tag = 'smem constant byte address 0x4 - core index']
  #allocation1 [shape = 'u32[144,128]{1,0:T(1,128)}', space=vmem, size = 0x12000, scoped, tag = 'internal scratch']
  #allocation2 [shape = 'f32[1,1]{1,0:T(1,128)S(1)}', space=vmem, size = 0x200, scoped, tag = 'scoped memory for d_net_gauss_forward.1']
  %s0 = inlined_call_operand.vmem [shape: f32[8,32], index: 0, kind: input, shape index: {}]
  %s1 = inlined_call_operand.vmem [shape: bf16[32,128], index: 1, kind: input, shape index: {}]
  %s2 = inlined_call_operand.vmem [shape: f32[1,128], index: 2, kind: input, shape index: {}]
  %s3 = inlined_call_operand.vmem [shape: bf16[128,128], index: 3, kind: input, shape index: {}]
  %s4 = inlined_call_operand.vmem [shape: f32[1,128], index: 4, kind: input, shape index: {}]
  %s5 = inlined_call_operand.vmem [shape: f32[1,128], index: 5, kind: input, shape index: {}]
  %s6 = inlined_call_operand.<no memory space> [shape: f32[1,1], index: 6, kind: input, shape index: {}]
  %s7 = inlined_call_operand.vmem [shape: f32[8,1], index: 7, kind: output, shape index: {}]
  %s8 = sld [smem:[#allocation0]]
  $region38: #{d_net_gauss_forward.1} parent=0
    _
  %s10 = ssub.s32 1, %s8
  %s11 = scalar_select 0, %s10, %s8
  %v12 = vstv %s6
  %13 = vst [vmem:[#allocation2] sm:$0x1] %v12
  // Predicated region
  $region2: #{d_net_gauss_forward.1} parent=0 // pred_check
    _
  $region3: #{d_net_gauss_forward.1} parent=0 // pred_check_branch
    %15 = sbr.rel (0) target = $region5
  $region4: #{d_net_gauss_forward.1} parent=0 // pred_region
    _
  $region5: #{d_net_gauss_forward.1} parent=0 // pred_fallthru
    _
  // Predicated region
  $region6: #{d_net_gauss_forward.1} parent=0 // pred_check
    _
  $region7: #{d_net_gauss_forward.1} parent=0 // pred_check_branch
    %17 = sbr.rel (0) target = $region9
  $region8: #{d_net_gauss_forward.1} parent=0 // pred_region
    _
  $region9: #{d_net_gauss_forward.1} parent=0 // pred_fallthru
    _
  // Predicated region
  $region10: #{d_net_gauss_forward.1} parent=0 // pred_check
    _
  $region11: #{d_net_gauss_forward.1} parent=0 // pred_check_branch
    %19 = sbr.rel (0) target = $region13
  $region12: #{d_net_gauss_forward.1} parent=0 // pred_region
    _
  $region13: #{d_net_gauss_forward.1} parent=0 // pred_fallthru
    _
  // Predicated region
  $region14: #{d_net_gauss_forward.1} parent=0 // pred_check
    _
  $region15: #{d_net_gauss_forward.1} parent=0 // pred_check_branch
    %21 = sbr.rel (0) target = $region17
  $region16: #{d_net_gauss_forward.1} parent=0 // pred_region
    _
  $region17: #{d_net_gauss_forward.1} parent=0 // pred_fallthru
    _
  // Predicated region
  $region18: #{d_net_gauss_forward.1} parent=0 // pred_check
    _
  $region19: #{d_net_gauss_forward.1} parent=0 // pred_check_branch
    %23 = sbr.rel (0) target = $region21
  $region20: #{d_net_gauss_forward.1} parent=0 // pred_region
    _
  $region21: #{d_net_gauss_forward.1} parent=0 // pred_fallthru
    _
  // Predicated region
  $region22: #{d_net_gauss_forward.1} parent=0 // pred_check
    _
  $region23: #{d_net_gauss_forward.1} parent=0 // pred_check_branch
    %25 = sbr.rel (0) target = $region25
  $region24: #{d_net_gauss_forward.1} parent=0 // pred_region
    _
  $region25: #{d_net_gauss_forward.1} parent=0 // pred_fallthru
    _
  // Predicated region
  $region26: #{d_net_gauss_forward.1} parent=0 // pred_check
    _
  $region27: #{d_net_gauss_forward.1} parent=0 // pred_check_branch
    %27 = sbr.rel (0) target = $region29
  $region28: #{d_net_gauss_forward.1} parent=0 // pred_region
    _
  $region29: #{d_net_gauss_forward.1} parent=0 // pred_fallthru
    _
  %v29 = vld [vmem:[%s0] sm:$0xff]
  %v30 = vpack.c.bf16 %v29, %v29
  %v31 = vld [vmem:[%s1] sm:$0xf]
  %v32 = vld [vmem:[%s1 + $0x4] sm:$0xf]
  %v33 = vld [vmem:[%s1 + $0x8] sm:$0xf]
  %v34 = vld [vmem:[%s1 + $0xc] sm:$0xf]
  %v35 = vld [vmem:[%s2] sm:$0x1]
  %v37 = vlaneseq
  %v38 = vshrl.u32 %v37, 7
  %v39 = vsub.s32 0, %v38
  %v40 = vrot.slane %v35, %v39
  %v46 = vunpack.c.l.b16 %v31
  %v47 = vunpack.c.l.b16 %v32
  %v48 = vunpack.c.l.b16 %v33
  %v49 = vunpack.c.l.b16 %v34
  %v50 = vpack.c.b16 %v47, %v46
  %v51 = vpack.c.b16 %v49, %v48
  %vm54 = vcmask 261120
  %v56 = vsel %vm54, %v30, 0
  %58 = vmatprep.subr.bf16.mxu0 0
  %59 = vmatpush1.bf16.msra.mxu0 %v50
  %60 = vmatprep.subr.bf16.mxu0 0
  %61 = vmatpush1.bf16.msra.mxu0 %v51
  %62 = vmatprep.subr.bf16.mxu0 0
  %63 = vmatpush1.bf16.msra.mxu0 0
  %64 = vmatprep.subr.bf16.mxu0 0
  %65 = vmatpush1.bf16.msra.mxu0 0
  %66 = vmatprep.subr.bf16.mxu0 0
  %67 = vmatpush1.bf16.msra.mxu0 0
  %68 = vmatprep.subr.bf16.mxu0 0
  %69 = vmatpush1.bf16.msra.mxu0 0
  %70 = vmatprep.subr.bf16.mxu0 0
  %71 = vmatpush1.bf16.msra.mxu0 0
  %72 = vmatprep.subr.bf16.mxu0 0
  %73 = vmatpush1.bf16.msra.mxu0 0
  %74 = vmatprep.subr.bf16.mxu0 0
  %75 = vmatpush1.bf16.msra.mxu0 0
  %76 = vmatprep.subr.bf16.mxu0 0
  %77 = vmatpush1.bf16.msra.mxu0 0
  %78 = vmatprep.subr.bf16.mxu0 0
  %79 = vmatpush1.bf16.msra.mxu0 0
  %80 = vmatprep.subr.bf16.mxu0 0
  %81 = vmatpush1.bf16.msra.mxu0 0
  %82 = vmatprep.subr.bf16.mxu0 0
  %83 = vmatpush1.bf16.msra.mxu0 0
  %84 = vmatprep.subr.bf16.mxu0 0
  %85 = vmatpush1.bf16.msra.mxu0 0
  %86 = vmatprep.subr.bf16.mxu0 0
  %87 = vmatpush1.bf16.msra.mxu0 0
  %88 = vmatprep.subr.bf16.mxu0 0
  %89 = vmatpush1.bf16.msra.mxu0 0
  %90 = vmatprep.mubr.bf16.mxu0 0
  %91 = vmatmul.mubr.bf16.gmra.mrb[0].mxu0 %v56
  %v92 = vpop.f32.mrb[0].mxu0
  %v93 = vadd.f32 %v40, %v92
  %v94 = vpop.f32.mrb[0].mxu0
  %v95 = vpop.f32.mrb[0].mxu0
  %v96 = vpop.f32.mrb[0].mxu0
  %97 = vdwg.mxu0
  %v98 = vmax.f32 %v93, 0.0
  %v99 = vpack.c.bf16 %v98, %v98
  %v100 = vld [vmem:[%s3] sm:$0xf]
  %v101 = vld [vmem:[%s3 + $0x4] sm:$0xf]
  %v102 = vld [vmem:[%s3 + $0x8] sm:$0xf]
  %v103 = vld [vmem:[%s3 + $0xc] sm:$0xf]
  %v104 = vld [vmem:[%s3 + $0x10] sm:$0xf]
  %v105 = vld [vmem:[%s3 + $0x14] sm:$0xf]
  %v106 = vld [vmem:[%s3 + $0x18] sm:$0xf]
  %v107 = vld [vmem:[%s3 + $0x1c] sm:$0xf]
  %v108 = vld [vmem:[%s3 + $0x20] sm:$0xf]
  %v109 = vld [vmem:[%s3 + $0x24] sm:$0xf]
  %v110 = vld [vmem:[%s3 + $0x28] sm:$0xf]
  %v111 = vld [vmem:[%s3 + $0x2c] sm:$0xf]
  %v112 = vld [vmem:[%s3 + $0x30] sm:$0xf]
  %v113 = vld [vmem:[%s3 + $0x34] sm:$0xf]
  %v114 = vld [vmem:[%s3 + $0x38] sm:$0xf]
  %v115 = vld [vmem:[%s3 + $0x3c] sm:$0xf]
  %v116 = vld [vmem:[%s4] sm:$0x1]
  %v118 = vlaneseq
  %v119 = vshrl.u32 %v118, 7
  %v120 = vsub.s32 0, %v119
  %v121 = vrot.slane %v116, %v120
  %v139 = vunpack.c.l.b16 %v100
  %v140 = vunpack.c.l.b16 %v101
  %v141 = vunpack.c.l.b16 %v102
  %v142 = vunpack.c.l.b16 %v103
  %v143 = vunpack.c.l.b16 %v104
  %v144 = vunpack.c.l.b16 %v105
  %v145 = vunpack.c.l.b16 %v106
  %v146 = vunpack.c.l.b16 %v107
  %v147 = vunpack.c.l.b16 %v108
  %v148 = vunpack.c.l.b16 %v109
  %v149 = vunpack.c.l.b16 %v110
  %v150 = vunpack.c.l.b16 %v111
  %v151 = vunpack.c.l.b16 %v112
  %v152 = vunpack.c.l.b16 %v113
  %v153 = vunpack.c.l.b16 %v114
  %v154 = vunpack.c.l.b16 %v115
  %v155 = vpack.c.b16 %v140, %v139
  %v156 = vpack.c.b16 %v142, %v141
  %v157 = vpack.c.b16 %v144, %v143
  %v158 = vpack.c.b16 %v146, %v145
  %v159 = vpack.c.b16 %v148, %v147
  %v160 = vpack.c.b16 %v150, %v149
  %v161 = vpack.c.b16 %v152, %v151
  %v162 = vpack.c.b16 %v154, %v153
  %171 = vmatprep.subr.bf16.mxu0 0
  %172 = vmatpush1.bf16.msra.mxu0 %v155
  %173 = vmatprep.subr.bf16.mxu0 0
  %174 = vmatpush1.bf16.msra.mxu0 %v156
  %175 = vmatprep.subr.bf16.mxu0 0
  %176 = vmatpush1.bf16.msra.mxu0 %v157
  %177 = vmatprep.subr.bf16.mxu0 0
  %178 = vmatpush1.bf16.msra.mxu0 %v158
  %179 = vmatprep.subr.bf16.mxu0 0
  %180 = vmatpush1.bf16.msra.mxu0 %v159
  %181 = vmatprep.subr.bf16.mxu0 0
  %182 = vmatpush1.bf16.msra.mxu0 %v160
  %183 = vmatprep.subr.bf16.mxu0 0
  %184 = vmatpush1.bf16.msra.mxu0 %v161
  %185 = vmatprep.subr.bf16.mxu0 0
  %186 = vmatpush1.bf16.msra.mxu0 %v162
  %187 = vmatprep.subr.bf16.mxu0 0
  %188 = vmatpush1.bf16.msra.mxu0 0
  %189 = vmatprep.subr.bf16.mxu0 0
  %190 = vmatpush1.bf16.msra.mxu0 0
  %191 = vmatprep.subr.bf16.mxu0 0
  %192 = vmatpush1.bf16.msra.mxu0 0
  %193 = vmatprep.subr.bf16.mxu0 0
  %194 = vmatpush1.bf16.msra.mxu0 0
  %195 = vmatprep.subr.bf16.mxu0 0
  %196 = vmatpush1.bf16.msra.mxu0 0
  %197 = vmatprep.subr.bf16.mxu0 0
  %198 = vmatpush1.bf16.msra.mxu0 0
  %199 = vmatprep.subr.bf16.mxu0 0
  %200 = vmatpush1.bf16.msra.mxu0 0
  %201 = vmatprep.subr.bf16.mxu0 0
  %202 = vmatpush1.bf16.msra.mxu0 0
  %203 = vmatprep.mubr.bf16.mxu0 0
  %204 = vmatmul.mubr.bf16.gmra.mrb[0].mxu0 %v99
  %v205 = vpop.f32.mrb[0].mxu0
  %v206 = vadd.f32 %v121, %v205
  %v207 = vpop.f32.mrb[0].mxu0
  %v208 = vpop.f32.mrb[0].mxu0
  %v209 = vpop.f32.mrb[0].mxu0
  %210 = vdwg.mxu0
  %v211 = vmax.f32 %v206, 0.0
  %v212 = vld [vmem:[%s5] sm:$0x1]
  %v214 = vlaneseq
  %v215 = vshrl.u32 %v214, 7
  %v216 = vsub.s32 0, %v215
  %v217 = vrot.slane %v212, %v216
  %v219 = vmul.f32 %v211, %v217
  %220 = vadd.xlane.f32.xlu0 %v219
  %v221 = vpop.xlane.xlu0 %220
  %v222 = vld [vmem:[#allocation2] sm:$0x1]
  %v224 = vlaneseq
  %v225 = vshrl.u32 %v224, 7
  %v226 = vsub.s32 0, %v225
  %v227 = vrot.slane %v222, %v226
  %v229 = vadd.f32 %v221, %v227
  %vm230 = vcmask 7168
  %231 = vst.msk [vmem:[%s7] sm:$0xff] %vm230, %v229
  // Predicated region
  $region30: #{d_net_gauss_forward.1} parent=0 // pred_check
    _
  $region31: #{d_net_gauss_forward.1} parent=0 // pred_check_branch
    %233 = sbr.rel (0) target = $region33
  $region32: #{d_net_gauss_forward.1} parent=0 // pred_region
    _
  $region33: #{d_net_gauss_forward.1} parent=0 // pred_fallthru
    _
  // Predicated region
  $region34: #{d_net_gauss_forward.1} parent=0 // pred_check
    _
  $region35: #{d_net_gauss_forward.1} parent=0 // pred_check_branch
    %235 = sbr.rel (0) target = $region37
  $region36: #{d_net_gauss_forward.1} parent=0 // pred_region
    _
  $region37: #{d_net_gauss_forward.1} parent=0 // pred_fallthru
    _

</llo_original>
